<compile_context>
chip_gen: v7x
topology: tpu7x:2x2x1
jax: 0.10.0
libtpu: 0.0.40
codegen_flags: <defaults>
</compile_context>

<pallas_src>
import math
import functools

import jax
import jax.numpy as jnp
import numpy as np
from jax import lax
from jax.experimental import pallas as pl
from jax.experimental.pallas import tpu as pltpu


# ---------------------------------------------------------------------------
# Row/column-tiled linear kernels: y = x @ W_t + b (+ residual).
# W_t is the pre-transposed (K, N) weight (torch nn.Linear stores (N, K)).
# ---------------------------------------------------------------------------
def _linear_kernel(x_ref, w_ref, b_ref, o_ref):
    y = jnp.dot(x_ref[...], w_ref[...], preferred_element_type=jnp.float32)
    o_ref[...] = (y + b_ref[...]).astype(o_ref.dtype)


def _linear_residual_kernel(x_ref, w_ref, b_ref, r_ref, o_ref):
    y = jnp.dot(x_ref[...], w_ref[...], preferred_element_type=jnp.float32)
    o_ref[...] = (y + b_ref[...] + r_ref[...].astype(jnp.float32)).astype(o_ref.dtype)


def pallas_linear(x, w_t, b, residual=None):
    """x: (M, K); w_t: (K, N); b: (N,); residual: optional (M, N) -> (M, N)."""
    M, K = x.shape
    N = w_t.shape[1]
    # Large tiles (cdiv grid handles ragged last tiles via masked partial stores);
    # tiling N keeps the weight/output VMEM footprint bounded for big d_model (v7x).
    tm = M if M <= 512 else 512
    tn = N if N <= 512 else 512
    grid = (pl.cdiv(M, tm), pl.cdiv(N, tn))

    in_specs = [
        pl.BlockSpec((tm, K), lambda i, j: (i, 0)),   # activation row tile (pipelined)
        pl.BlockSpec((K, tn), lambda i, j: (0, j)),   # weight column tile
        pl.BlockSpec((1, tn), lambda i, j: (0, j)),   # bias
    ]
    args = [x, w_t, b.reshape(1, N)]
    if residual is not None:
        in_specs.append(pl.BlockSpec((tm, tn), lambda i, j: (i, j)))
        args.append(residual)
        kernel = _linear_residual_kernel
    else:
        kernel = _linear_kernel

    return pl.pallas_call(
        kernel,
        out_shape=jax.ShapeDtypeStruct((M, N), x.dtype),
        grid=grid,
        in_specs=in_specs,
        out_specs=pl.BlockSpec((tm, tn), lambda i, j: (i, j)),
        compiler_params=pltpu.CompilerParams(
            dimension_semantics=("parallel", "parallel")),
    )(*args)


# ---------------------------------------------------------------------------
# Complex ("real/phase") scaled-dot-product attention kernel.
# Grid = (B, H, n_kv).  One (batch, head) pair per step; KV axis is an
# "arbitrary" reduction axis with online-softmax state in VMEM scratch.
# ---------------------------------------------------------------------------
def _attention_kernel(mask_ref, qr_ref, qp_ref, kr_ref, kp_ref, vr_ref, vp_ref,
                      xr_ref, xp_ref, *rest, d_k, with_attn):
    if with_attn:
        attn_ref, m_sc, l_sc, accr_sc, accp_sc = rest
    else:
        m_sc, l_sc, accr_sc, accp_sc = rest

    kv = pl.program_id(2)
    n_kv = pl.num_programs(2)

    @pl.when(kv == 0)
    def _():
        m_sc[...] = jnp.full(m_sc.shape, -jnp.inf, jnp.float32)
        l_sc[...] = jnp.zeros(l_sc.shape, jnp.float32)
        accr_sc[...] = jnp.zeros(accr_sc.shape, jnp.float32)
        accp_sc[...] = jnp.zeros(accp_sc.shape, jnp.float32)

    qr = qr_ref[0, 0].astype(jnp.float32)   # (S, d_k)
    qp = qp_ref[0, 0].astype(jnp.float32)
    kr = kr_ref[0, 0].astype(jnp.float32)   # (tkv, d_k)
    kp = kp_ref[0, 0].astype(jnp.float32)

    dn = (((1,), (1,)), ((), ()))            # contract the d_k axis of both operands
    sr = (lax.dot_general(qr, kr, dn, preferred_element_type=jnp.float32)
          - lax.dot_general(qp, kp, dn, preferred_element_type=jnp.float32))  # (S, tkv)
    sp = (lax.dot_general(qr, kp, dn, preferred_element_type=jnp.float32)
          + lax.dot_general(qp, kr, dn, preferred_element_type=jnp.float32))

    inv_sqrt_dk = 1.0 / math.sqrt(d_k)
    scores = jnp.sqrt(sr * sr + sp * sp) * inv_sqrt_dk
    # Fused masked_fill (matches the reference: hard replace, not additive bias).
    scores = jnp.where(mask_ref[0] == 0, jnp.float32(-1000000000.0), scores)

    # Online softmax update.
    m_prev = m_sc[...]
    m_new = jnp.maximum(m_prev, jnp.max(scores, axis=-1, keepdims=True))
    alpha = jnp.exp(m_prev - m_new)
    p = jnp.exp(scores - m_new)
    l_new = alpha * l_sc[...] + jnp.sum(p, axis=-1, keepdims=True)
    l_sc[...] = l_new
    m_sc[...] = m_new

    accr_sc[...] = alpha * accr_sc[...] + jnp.dot(
        p, vr_ref[0, 0].astype(jnp.float32), preferred_element_type=jnp.float32)
    accp_sc[...] = alpha * accp_sc[...] + jnp.dot(
        p, vp_ref[0, 0].astype(jnp.float32), preferred_element_type=jnp.float32)

    if with_attn:
        # Only valid when the KV axis is a single tile (n_kv == 1): l_new is the full
        # row sum, so p / l_new is the exact softmax.
        attn_ref[0, 0] = (p / l_new).astype(attn_ref.dtype)

    @pl.when(kv == n_kv - 1)
    def _():
        # NOTE: pl.reciprocal(l, approx=True) would move this to the EUP; exact divide
        # kept to hold the 2e-5 verification tolerance.
        inv_l = 1.0 / l_sc[...]
        xr_ref[0, 0] = (accr_sc[...] * inv_l).astype(xr_ref.dtype)
        xp_ref[0, 0] = (accp_sc[...] * inv_l).astype(xp_ref.dtype)


def _pick_kv_tile(S):
    if S <= 512:
        return S
    for cand in (512, 256, 128):
        if S % cand == 0:
            return cand
    return S


def pallas_attention(mask, q_r, k_r, v_r, q_p, k_p, v_p, *, kv_tile=None,
                     return_attn=False):
    """mask: (B,S,S) int32; q/k/v real+phase: (B,H,S,d_k) head-major.

    Returns (x_real, x_phase) each (B,H,S,d_k) [+ attn (B,H,S,S) if return_attn]."""
    B, H, S, d_k = q_r.shape
    if kv_tile is None:
        kv_tile = _pick_kv_tile(S)
    assert S % kv_tile == 0, "kv_tile must divide S"
    n_kv = S // kv_tile
    if return_attn and n_kv != 1:
        # TODO(synk): exact attention-probs output with a multi-tile KV axis would need a
        # second rescale pass; restrict to the single-tile path (matches eval-size use).
        raise ValueError("return_attn=True requires a single KV tile (kv_tile == S)")

    q_spec = pl.BlockSpec((1, 1, S, d_k), lambda b, h, k: (b, h, 0, 0))
    kv_spec = pl.BlockSpec((1, 1, kv_tile, d_k), lambda b, h, k: (b, h, k, 0))

    out_shape = [jax.ShapeDtypeStruct((B, H, S, d_k), q_r.dtype),
                 jax.ShapeDtypeStruct((B, H, S, d_k), q_r.dtype)]
    out_specs = [pl.BlockSpec((1, 1, S, d_k), lambda b, h, k: (b, h, 0, 0)),
                 pl.BlockSpec((1, 1, S, d_k), lambda b, h, k: (b, h, 0, 0))]
    if return_attn:
        out_shape.append(jax.ShapeDtypeStruct((B, H, S, S), jnp.float32))
        out_specs.append(pl.BlockSpec((1, 1, S, kv_tile), lambda b, h, k: (b, h, 0, k)))

    return pl.pallas_call(
        functools.partial(_attention_kernel, d_k=d_k, with_attn=return_attn),
        out_shape=tuple(out_shape),
        grid=(B, H, n_kv),
        in_specs=[
            pl.BlockSpec((1, S, kv_tile), lambda b, h, k: (b, 0, k)),   # int32 mask
            q_spec, q_spec,          # q_real, q_phase
            kv_spec, kv_spec,        # k_real, k_phase
            kv_spec, kv_spec,        # v_real, v_phase
        ],
        out_specs=tuple(out_specs),
        scratch_shapes=[
            pltpu.VMEM((S, 1), jnp.float32),      # running max m
            pltpu.VMEM((S, 1), jnp.float32),      # running sum l
            pltpu.VMEM((S, d_k), jnp.float32),    # acc real
            pltpu.VMEM((S, d_k), jnp.float32),    # acc phase
        ],
        compiler_params=pltpu.CompilerParams(
            dimension_semantics=("parallel", "parallel", "arbitrary")),
    )(mask, q_r, q_p, k_r, k_p, v_r, v_p)


# ---------------------------------------------------------------------------
# Full MultiHeadedAttention forward (Pallas kernels for all matmul hot paths).
# ---------------------------------------------------------------------------
def multi_headed_attention(real, phase, params, mask, *, h, kv_tile=None,
                           return_attn=False):
    B, S, D = real.shape
    d_k = D // h

    # Fuse the three Q/K/V projection weights into one matmul per stream and
    # pre-transpose to (K, N) so the kernel does a plain x @ W_t (no in-kernel
    # weight relayout).  In a real model this is done once at parameter-load time.
    w_qkv_r = jnp.concatenate(params["wr"][:3], axis=0).T   # (D, 3D)
    b_qkv_r = jnp.concatenate(params["br"][:3], axis=0)     # (3D,)
    w_qkv_p = jnp.concatenate(params["wp"][:3], axis=0).T
    b_qkv_p = jnp.concatenate(params["bp"][:3], axis=0)

    qkv_r = pallas_linear(real.reshape(B * S, D), w_qkv_r, b_qkv_r)
    qkv_p = pallas_linear(phase.reshape(B * S, D), w_qkv_p, b_qkv_p)

    # Head-major layout (B, H, S, d_k) so every attention block is full-width on its
    # last dim (no sub-128-lane slicing inside the kernel).
    qkv_r = qkv_r.reshape(B, S, 3, h, d_k).transpose(2, 0, 3, 1, 4)   # (3,B,H,S,dk)
    qkv_p = qkv_p.reshape(B, S, 3, h, d_k).transpose(2, 0, 3, 1, 4)
    qr, kr, vr = qkv_r[0], qkv_r[1], qkv_r[2]
    qp, kp, vp = qkv_p[0], qkv_p[1], qkv_p[2]

    mask_i = mask.astype(jnp.int32)
    outs = pallas_attention(mask_i, qr, kr, vr, qp, kp, vp,
                            kv_tile=kv_tile, return_attn=return_attn)
    if return_attn:
        xr, xp, attn = outs
    else:
        xr, xp = outs

    # Merge heads back to (B, S, D).
    xr = xr.transpose(0, 2, 1, 3).reshape(B * S, D)
    xp = xp.transpose(0, 2, 1, 3).reshape(B * S, D)

    # Output projection with the residual add fused into the kernel.
    out_r = pallas_linear(xr, params["wr"][3].T, params["br"][3],
                          residual=real.reshape(B * S, D)).reshape(B, S, D)
    out_p = pallas_linear(xp, params["wp"][3].T, params["bp"][3],
                          residual=phase.reshape(B * S, D)).reshape(B, S, D)
    if return_attn:
        return out_r, out_p, attn
    return out_r, out_p


# ---------------------------------------------------------------------------
# Pure-JAX reference (mirrors the PyTorch code exactly) for verification.
# ---------------------------------------------------------------------------
def reference(real, phase, params, mask, *, h):
    B, S, D = real.shape
    d_k = D // h

    def lin(x, w, b):
        return x @ w.T + b

    def split(x):
        return x.reshape(B, S, h, d_k).transpose(0, 2, 1, 3)

    qr = split(lin(real, params["wr"][0], params["br"][0]))
    kr = split(lin(real, params["wr"][1], params["br"][1]))
    vr = split(lin(real, params["wr"][2], params["br"][2]))
    qp = split(lin(phase, params["wp"][0], params["bp"][0]))
    kp = split(lin(phase, params["wp"][1], params["bp"][1]))
    vp = split(lin(phase, params["wp"][2], params["bp"][2]))

    sr = qr @ kr.transpose(0, 1, 3, 2) - qp @ kp.transpose(0, 1, 3, 2)
    sp = qr @ kp.transpose(0, 1, 3, 2) + qp @ kr.transpose(0, 1, 3, 2)
    scores = jnp.sqrt(sr * sr + sp * sp) / math.sqrt(d_k)
    scores = jnp.where(mask[:, None, :, :] == 0, -1000000000.0, scores)
    p = jax.nn.softmax(scores, axis=-1)

    xr = (p @ vr).transpose(0, 2, 1, 3).reshape(B, S, D)
    xp = (p @ vp).transpose(0, 2, 1, 3).reshape(B, S, D)
    out_r = lin(xr, params["wr"][3], params["br"][3]) + real
    out_p = lin(xp, params["wp"][3], params["bp"][3]) + phase
    return out_r, out_p, p


def make_params(key, D):
    keys = jax.random.split(key, 16)
    bound = 1.0 / math.sqrt(D)   # torch nn.Linear default uniform init bound
    # NOTE: the torch module deepcopies one Linear 4x (clones); here each of the 4
    # projections gets its own deterministic init (shapes identical).
    wr = [jax.random.uniform(keys[i], (D, D), jnp.float32, -bound, bound) for i in range(4)]
    br = [jax.random.uniform(keys[4 + i], (D,), jnp.float32, -bound, bound) for i in range(4)]
    wp = [jax.random.uniform(keys[8 + i], (D, D), jnp.float32, -bound, bound) for i in range(4)]
    bp = [jax.random.uniform(keys[12 + i], (D,), jnp.float32, -bound, bound) for i in range(4)]
    return {"wr": wr, "br": br, "wp": wp, "bp": bp}


# ---------------------------------------------------------------------------
if __name__ == "__main__":
    key = jax.random.PRNGKey(0)
    k_params, k_real, k_phase, k_params2, k_real2, k_phase2 = jax.random.split(key, 6)

    # ---- Test 1: small shape, single KV tile, attention-probs output checked ----
    B, S, D, H = 2, 8, 32, 4   # d_k = 8
    params = make_params(k_params, D)
    real = jax.random.normal(k_real, (B, S, D), jnp.float32)
    phase = jax.random.normal(k_phase, (B, S, D), jnp.float32)
    mask = jnp.tril(jnp.ones((S, S), jnp.int32))[None].repeat(B, axis=0)   # causal

    out_r, out_p, attn = multi_headed_attention(real, phase, params, mask, h=H,
                                                return_attn=True)
    jax.block_until_ready((out_r, out_p, attn))

    ref_r, ref_p, ref_attn = reference(real, phase, params, mask, h=H)
    np.testing.assert_allclose(np.asarray(out_r), np.asarray(ref_r), rtol=2e-5, atol=2e-5)
    np.testing.assert_allclose(np.asarray(out_p), np.asarray(ref_p), rtol=2e-5, atol=2e-5)
    np.testing.assert_allclose(np.asarray(attn), np.asarray(ref_attn), rtol=2e-5, atol=2e-5)

    # ---- Test 2: multi-tile KV axis (online softmax path), no probs output ----
    B2, S2, D2, H2 = 1, 256, 64, 4   # d_k = 16, kv_tile = 128 -> 2 KV steps
    params2 = make_params(k_params2, D2)
    real2 = jax.random.normal(k_real2, (B2, S2, D2), jnp.float32)
    phase2 = jax.random.normal(k_phase2, (B2, S2, D2), jnp.float32)
    mask2 = jnp.tril(jnp.ones((S2, S2), jnp.int32))[None].repeat(B2, axis=0)

    out_r2, out_p2 = multi_headed_attention(real2, phase2, params2, mask2, h=H2,
                                            kv_tile=128, return_attn=False)
    jax.block_until_ready((out_r2, out_p2))

    ref_r2, ref_p2, _ = reference(real2, phase2, params2, mask2, h=H2)
    np.testing.assert_allclose(np.asarray(out_r2), np.asarray(ref_r2), rtol=1e-4, atol=1e-4)
    np.testing.assert_allclose(np.asarray(out_p2), np.asarray(ref_p2), rtol=1e-4, atol=1e-4)

    print("KERNEL_OK")
</pallas_src>

<mosaic_0001>
module attributes {stable_mosaic.version = 11 : i64} {
  func.func @_linear_kernel(%arg0: i32, %arg1: i32, %arg2: memref<16x32xf32, #tpu.memory_space<vmem>>, %arg3: memref<32x96xf32, #tpu.memory_space<vmem>>, %arg4: memref<1x96xf32, #tpu.memory_space<vmem>>, %arg5: memref<16x96xf32, #tpu.memory_space<vmem>>) attributes {dimension_semantics = [#tpu.dimension_semantics<parallel>, #tpu.dimension_semantics<parallel>], iteration_bounds = array<i64: 1, 1>, scalar_prefetch = 0 : i64, scratch_operands = 0 : i64, tpu.core_type = #tpu.core_type<tc>, window_params = [{transform_indices = @transform_0, window_bounds = array<i64: 16, 32>}, {transform_indices = @transform_1, window_bounds = array<i64: 32, 96>}, {transform_indices = @transform_2, window_bounds = array<i64: 1, 96>}, {transform_indices = @transform_3, window_bounds = array<i64: 16, 96>}]} {
    %c0 = arith.constant 0 : index
    %c0_0 = arith.constant 0 : index
    %0 = vector.load %arg2[%c0, %c0_0] : memref<16x32xf32, #tpu.memory_space<vmem>>, vector<16x32xf32>
    %c0_1 = arith.constant 0 : index
    %c0_2 = arith.constant 0 : index
    %1 = vector.load %arg3[%c0_1, %c0_2] : memref<32x96xf32, #tpu.memory_space<vmem>>, vector<32x96xf32>
    %cst = arith.constant dense<0.000000e+00> : vector<16x96xf32>
    %2 = tpu.matmul %0, %1, %cst {dimension_numbers = #tpu.dot_dimension_numbers<[1], [0], [0], [1], [0, 0, 1, 1], [], []>} : vector<16x32xf32>, vector<32x96xf32>, vector<16x96xf32> -> vector<16x96xf32>
    %c0_3 = arith.constant 0 : index
    %c0_4 = arith.constant 0 : index
    %3 = vector.load %arg4[%c0_3, %c0_4] : memref<1x96xf32, #tpu.memory_space<vmem>>, vector<1x96xf32>
    %4 = vector.broadcast %3 : vector<1x96xf32> to vector<16x96xf32>
    %5 = arith.addf %2, %4 : vector<16x96xf32>
    %c0_5 = arith.constant 0 : index
    %c0_6 = arith.constant 0 : index
    %6 = vector.load %arg5[%c0_5, %c0_6] : memref<16x96xf32, #tpu.memory_space<vmem>>, vector<16x96xf32>
    tpu.vector_store %arg5[%c0_5, %c0_6], %5 {strides = array<i32>} : memref<16x96xf32, #tpu.memory_space<vmem>>, vector<16x96xf32>,
    return
  }
  func.func @transform_0(%arg0: i32, %arg1: i32) -> (i32, i32) {
    %c0_i32 = arith.constant 0 : i32
    %c0_i32_0 = arith.constant 0 : i32
    return %arg0, %c0_i32 : i32, i32
  }
  func.func @transform_1(%arg0: i32, %arg1: i32) -> (i32, i32) {
    %c0_i32 = arith.constant 0 : i32
    %c0_i32_0 = arith.constant 0 : i32
    return %c0_i32, %arg1 : i32, i32
  }
  func.func @transform_2(%arg0: i32, %arg1: i32) -> (i32, i32) {
    %c0_i32 = arith.constant 0 : i32
    %c0_i32_0 = arith.constant 0 : i32
    return %c0_i32, %arg1 : i32, i32
  }
  func.func @transform_3(%arg0: i32, %arg1: i32) -> (i32, i32) {
    %c0_i32 = arith.constant 0 : i32
    return %arg0, %arg1 : i32, i32
  }
}

</mosaic_0001>

<llo_original>
// kernel: tpu_custom_call.1
$region0: #{tpu_custom_call.1}
  #allocation0 [shape = 'u32[]', space=smem, size = 0x4, offset = 0x4, fixed_abs, tag = 'smem constant byte address 0x4 - core index']
  #allocation1 [shape = 'u32[144,128]{1,0:T(1,128)}', space=vmem, size = 0x12000, scoped, tag = 'internal scratch']
  %s0 = inlined_call_operand.hbm [shape: f32[16,32], index: 0, kind: input, shape index: {}]
  %s1 = inlined_call_operand.hbm [shape: f32[32,96], index: 1, kind: input, shape index: {}]
  %s2 = inlined_call_operand.vmem [shape: f32[1,96], index: 2, kind: input, shape index: {}]
  %s3 = inlined_call_operand.hbm [shape: f32[16,96], index: 3, kind: output, shape index: {}]
  %s4 = sld [smem:[#allocation0]]
  $region30: #{tpu_custom_call.1} parent=0
    _
  %s6 = ssub.s32 1, %s4
  %s7 = scalar_select 0, %s6, %s4
  $region1: #{tpu_custom_call.1} parent=0
    #allocation2 [shape = 'u8[8192]{0}', space=vmem, size = 0x2000, scoped, tag = 'input window, operand 0, single buffered']
    #allocation3 [shape = 's32[1]{0}', space=sflag, size = 0x4, scoped, tag = 'scoped memory for tpu_custom_call.1']
    #allocation4 [shape = 's32[1]{0}', space=sflag, size = 0x4, scoped, tag = 'scoped memory for tpu_custom_call.1']
    #allocation5 [shape = 'u8[16384]{0}', space=vmem, size = 0x4000, scoped, tag = 'input window, operand 1, single buffered']
    #allocation6 [shape = 's32[1]{0}', space=sflag, size = 0x4, scoped, tag = 'scoped memory for tpu_custom_call.1']
    #allocation7 [shape = 'u8[8192]{0}', space=vmem, size = 0x2000, scoped, tag = 'output window, operand 0, single buffered']
    %8 = vsyncpa [#allocation3], 0
    %9 = vsyncpa [#allocation6], 0
    %10 = vsyncpa [#allocation4], 0
    // Predicated region
    $region2: #{tpu_custom_call.1} parent=1 // pred_check
      _
    $region3: #{tpu_custom_call.1} parent=1 // pred_check_branch
      %12 = sbr.rel (0) target = $region5
    $region4: #{tpu_custom_call.1} parent=1 // pred_region
      %s14 = ssub.s32 256, 256
      %15 = vsyncadd [#allocation3], %s14
      %s16 = sshll.u32 [#allocation2], 4
      %s17 = int_to_ptr.vmem [resolvable:$true] %s16
      %22 = dma.hbm_to_vmem [thread:$0]  %s0, 256, %s17, [#allocation3], 128, 128, 8
    $region5: #{tpu_custom_call.1} parent=1 // pred_fallthru
      _
    // Predicated region
    $region6: #{tpu_custom_call.1} parent=1 // pred_check
      _
    $region7: #{tpu_custom_call.1} parent=1 // pred_check_branch
      %24 = sbr.rel (0) target = $region9
    $region8: #{tpu_custom_call.1} parent=1 // pred_region
      %s26 = ssub.s32 512, 512
      %27 = vsyncadd [#allocation6], %s26
      %s28 = sshll.u32 [#allocation5], 4
      %s29 = int_to_ptr.vmem [resolvable:$true] %s28
      %34 = dma.hbm_to_vmem [thread:$0]  %s1, 512, %s29, [#allocation6], 128, 128, 8
    $region9: #{tpu_custom_call.1} parent=1 // pred_fallthru
      _
    // Predicated region
    $region10: #{tpu_custom_call.1} parent=1 // pred_check
      _
    $region11: #{tpu_custom_call.1} parent=1 // pred_check_branch
      %36 = sbr.rel (0) target = $region13
    $region12: #{tpu_custom_call.1} parent=1 // pred_region
      _
    $region13: #{tpu_custom_call.1} parent=1 // pred_fallthru
      _
    // Predicated region
    $region14: #{tpu_custom_call.1} parent=1 // pred_check
      _
    $region15: #{tpu_custom_call.1} parent=1 // pred_check_branch
      %38 = sbr.rel (0) target = $region17
    $region16: #{tpu_custom_call.1} parent=1 // pred_region
      %39 = dma.done [#allocation3], 256
    $region17: #{tpu_custom_call.1} parent=1 // pred_fallthru
      _
    // Predicated region
    $region18: #{tpu_custom_call.1} parent=1 // pred_check
      _
    $region19: #{tpu_custom_call.1} parent=1 // pred_check_branch
      %41 = sbr.rel (0) target = $region21
    $region20: #{tpu_custom_call.1} parent=1 // pred_region
      %42 = dma.done [#allocation6], 512
    $region21: #{tpu_custom_call.1} parent=1 // pred_fallthru
      _
    %v43 = vld [vmem:[#allocation2] sm:$0xff]
    %v44 = vld [vmem:[#allocation2 + $0x8] sm:$0xff]
    %v45 = vld [vmem:[#allocation5] sm:$0xff]
    %v46 = vld [vmem:[#allocation5 + $0x8] sm:$0xff]
    %v47 = vld [vmem:[#allocation5 + $0x10] sm:$0xff]
    %v48 = vld [vmem:[#allocation5 + $0x18] sm:$0xff]
    %v49 = vld [vmem:[%s2] sm:$0x1]
    %v51 = vlaneseq
    %v52 = vshrl.u32 %v51, 7
    %v53 = vsub.s32 0, %v52
    %v54 = vrot.slane %v49, %v53
    %vm56 = vcmask 261120
    %v58 = vsel %vm56, %v43, 0
    %v61 = vsel %vm56, %v44, 0
    %63 = vmatprep.subr.mxu0 0.0
    %64 = vmatpush1.msra.mxu0 %v45
    %65 = vmatprep.subr.mxu0 0.0
    %66 = vmatpush1.msra.mxu0 %v46
    %67 = vmatprep.subr.mxu0 0.0
    %68 = vmatpush1.msra.mxu0 %v47
    %69 = vmatprep.subr.mxu0 0.0
    %70 = vmatpush1.msra.mxu0 %v48
    %71 = vmatprep.subr.mxu0 0.0
    %72 = vmatpush1.msra.mxu0 0.0
    %73 = vmatprep.subr.mxu0 0.0
    %74 = vmatpush1.msra.mxu0 0.0
    %75 = vmatprep.subr.mxu0 0.0
    %76 = vmatpush1.msra.mxu0 0.0
    %77 = vmatprep.subr.mxu0 0.0
    %78 = vmatpush1.msra.mxu0 0.0
    %79 = vmatprep.subr.mxu0 0.0
    %80 = vmatpush1.msra.mxu0 0.0
    %81 = vmatprep.subr.mxu0 0.0
    %82 = vmatpush1.msra.mxu0 0.0
    %83 = vmatprep.subr.mxu0 0.0
    %84 = vmatpush1.msra.mxu0 0.0
    %85 = vmatprep.subr.mxu0 0.0
    %86 = vmatpush1.msra.mxu0 0.0
    %87 = vmatprep.subr.mxu0 0.0
    %88 = vmatpush1.msra.mxu0 0.0
    %89 = vmatprep.subr.mxu0 0.0
    %90 = vmatpush1.msra.mxu0 0.0
    %91 = vmatprep.subr.mxu0 0.0
    %92 = vmatpush1.msra.mxu0 0.0
    %93 = vmatprep.subr.mxu0 0.0
    %94 = vmatpush1.msra.mxu0 0.0
    %95 = vmatprep.subr.mxu0 0.0
    %96 = vmatpush1.msra.mxu0 0.0
    %97 = vmatprep.subr.mxu0 0.0
    %98 = vmatpush1.msra.mxu0 0.0
    %99 = vmatprep.subr.mxu0 0.0
    %100 = vmatpush1.msra.mxu0 0.0
    %101 = vmatprep.subr.mxu0 0.0
    %102 = vmatpush1.msra.mxu0 0.0
    %103 = vmatprep.subr.mxu0 0.0
    %104 = vmatpush1.msra.mxu0 0.0
    %105 = vmatprep.subr.mxu0 0.0
    %106 = vmatpush1.msra.mxu0 0.0
    %107 = vmatprep.subr.mxu0 0.0
    %108 = vmatpush1.msra.mxu0 0.0
    %109 = vmatprep.subr.mxu0 0.0
    %110 = vmatpush1.msra.mxu0 0.0
    %111 = vmatprep.subr.mxu0 0.0
    %112 = vmatpush1.msra.mxu0 0.0
    %113 = vmatprep.subr.mxu0 0.0
    %114 = vmatpush1.msra.mxu0 0.0
    %115 = vmatprep.subr.mxu0 0.0
    %116 = vmatpush1.msra.mxu0 0.0
    %117 = vmatprep.subr.mxu0 0.0
    %118 = vmatpush1.msra.mxu0 0.0
    %119 = vmatprep.subr.mxu0 0.0
    %120 = vmatpush1.msra.mxu0 0.0
    %121 = vmatprep.subr.mxu0 0.0
    %122 = vmatpush1.msra.mxu0 0.0
    %123 = vmatprep.subr.mxu0 0.0
    %124 = vmatpush1.msra.mxu0 0.0
    %125 = vmatprep.subr.mxu0 0.0
    %126 = vmatpush1.msra.mxu0 0.0
    %127 = vmatprep.mubr.f32.mxu0 0.0
    %128 = vmatmul.mubr.f32.gmra.mrb[0].mxu0 %v58
    %v129 = vpop.f32.mrb[0].mxu0
    %v130 = vadd.f32 %v54, %v129
    %v131 = vpop.f32.mrb[0].mxu0
    %132 = vmatprep.mubr.f32.mxu0 0.0
    %133 = vmatmul.mubr.f32.gmra.mrb[0].mxu0 %v61
    %v134 = vpop.f32.mrb[0].mxu0
    %v135 = vadd.f32 %v54, %v134
    %v136 = vpop.f32.mrb[0].mxu0
    %137 = vdwg.mxu0
    %vm138 = vcmask 785408
    %139 = vst.msk [vmem:[#allocation7] sm:$0xff] %vm138, %v130
    %140 = vst.msk [vmem:[#allocation7 + $0x8] sm:$0xff] %vm138, %v135
    // Predicated region
    $region22: #{tpu_custom_call.1} parent=1 // pred_check
      _
    $region23: #{tpu_custom_call.1} parent=1 // pred_check_branch
      %142 = sbr.rel (0) target = $region25
    $region24: #{tpu_custom_call.1} parent=1 // pred_region
      %s144 = ssub.s32 256, 256
      %145 = vsyncadd [#allocation4], %s144
      %s146 = sshll.u32 [#allocation7], 4
      %s147 = int_to_ptr.vmem [resolvable:$true] %s146
      %152 = dma.vmem_to_hbm [thread:$0]  %s147, 256, %s3, [#allocation4], 128, 128, 8
    $region25: #{tpu_custom_call.1} parent=1 // pred_fallthru
      _
    // Predicated region
    $region26: #{tpu_custom_call.1} parent=1 // pred_check
      _
    $region27: #{tpu_custom_call.1} parent=1 // pred_check_branch
      %154 = sbr.rel (0) target = $region29
    $region28: #{tpu_custom_call.1} parent=1 // pred_region
      %155 = dma.done [#allocation4], 256
    $region29: #{tpu_custom_call.1} parent=1 // pred_fallthru
      _
    %156 = vsyncpa [#allocation3], 1
    %157 = vsyncpa [#allocation6], 1
    %158 = vsyncpa [#allocation4], 1

</llo_original>
